<compile_context>
chip_gen: v7x
topology: tpu7x:2x2x1
jax: 0.10.0
libtpu: 0.0.40
codegen_flags: <defaults>
</compile_context>

<pallas_src>
import functools

import jax
import jax.numpy as jnp
from jax import lax
from jax.experimental import pallas as pl
from jax.experimental.pallas import tpu as pltpu

LANES = 128
BM = 512           # rows per grid step; sweep 512 / 1024 / 2048
NCORES = 2         # leading "parallel" grid axis (v7x megacore split)
_LOG_EPS_FLOOR = 18.420680743952367   # = -log(1e-8), eps floor of the reference


def _make_kernel(pos_weight, focal_alpha, focal_gamma, bpc, n_valid, needs_mask):
    """Build the combined-loss partial-sum kernel with constants baked in."""
    pos_weight = float(pos_weight)
    focal_alpha = float(focal_alpha)
    focal_gamma = float(focal_gamma)

    def kernel(x_ref, t_ref, o_ref):
        c = pl.program_id(0)   # core / parallel axis
        i = pl.program_id(1)   # reduction axis (arbitrary)

        @pl.when(i == 0)
        def _init():
            o_ref[...] = jnp.zeros_like(o_ref)

        x = x_ref[...].astype(jnp.float32)
        t = t_ref[...].astype(jnp.float32)
        shape = x.shape  # (bm, LANES)

        mask = None
        if needs_mask:
            # Global flat index of each element using the *virtual* block id
            # (c*bpc + i); for duplicate/OOB blocks this is >= n_valid so the
            # whole tile is masked out.  Mask is applied to x/t BEFORE any
            # log/exp so garbage OOB data cannot poison the sums.
            # NOTE: int32 flat index assumes n_valid < 2**31 elements.
            row = lax.broadcasted_iota(jnp.int32, shape, 0)
            lane = lax.broadcasted_iota(jnp.int32, shape, 1)
            base = (c * bpc + i) * (shape[0] * LANES)
            flat = base + row * LANES + lane
            mask = flat < n_valid
            x = jnp.where(mask, x, 0.0)
            t = jnp.where(mask, t, 0.0)

        # --- sigmoid + BCE logs via stable softplus (4 EUP ops / element) ---
        a = jnp.abs(x)
        em = jnp.exp(-a)                      # exp(-|x|) in (0, 1]
        r = 1.0 / (1.0 + em)
        p = jnp.where(x >= 0.0, r, em * r)    # stable sigmoid(x)
        lse = jnp.log(1.0 + em)               # log1p(exp(-|x|))
        # -log(p + 1e-8) and -log(1 - p + 1e-8); eps floor kept via clamp.
        l_pos = jnp.minimum(jnp.maximum(-x, 0.0) + lse, _LOG_EPS_FLOOR)
        l_neg = jnp.minimum(jnp.maximum(x, 0.0) + lse, _LOG_EPS_FLOOR)

        bce = pos_weight * t * l_pos + (1.0 - t) * l_neg
        pt = jnp.exp(-bce)
        om = 1.0 - pt
        if focal_gamma == 2.0:
            mod = om * om
        elif focal_gamma.is_integer():
            mod = om ** int(focal_gamma)
        else:
            mod = om ** focal_gamma
        focal = focal_alpha * mod * bce

        if needs_mask:
            p = jnp.where(mask, p, 0.0)
            focal = jnp.where(mask, focal, 0.0)
        # t is already zero on masked lanes.

        # Per-lane partial sums (sublane reduce), stacked into one (4,128) RMW.
        inter = jnp.sum(p * t, axis=0, keepdims=True)
        psum = jnp.sum(p, axis=0, keepdims=True)
        tsum = jnp.sum(t, axis=0, keepdims=True)
        fsum = jnp.sum(focal, axis=0, keepdims=True)
        o_ref[...] += jnp.concatenate([inter, psum, tsum, fsum], axis=0)

    return kernel


@functools.partial(
    jax.jit,
    static_argnames=("pos_weight", "alpha_dice", "alpha_focal",
                     "focal_alpha", "focal_gamma", "smooth"))
def combined_loss(preds, targets, *, pos_weight=1.0, alpha_dice=0.5,
                  alpha_focal=0.5, focal_alpha=0.5, focal_gamma=2.0,
                  smooth=1e-6):
    n = preds.size
    x = preds.reshape(-1)
    t = targets.reshape(-1)
    if not jnp.issubdtype(x.dtype, jnp.floating):
        x = x.astype(jnp.float32)
    if not jnp.issubdtype(t.dtype, jnp.floating):
        t = t.astype(jnp.float32)

    # Pad only to a multiple of 128 lanes (skipped when already aligned);
    # ragged/partial blocks are masked inside the kernel.
    n_pad = pl.cdiv(n, LANES) * LANES
    if n_pad != n:
        x = jnp.pad(x, (0, n_pad - n))
        t = jnp.pad(t, (0, n_pad - n))
    rows = n_pad // LANES

    bm = BM if rows >= BM else rows            # small inputs: one full-array block
    total_blocks = pl.cdiv(rows, bm)
    bpc = pl.cdiv(total_blocks, NCORES)        # blocks per core
    needs_mask = (NCORES * bpc * bm * LANES) != n

    x2 = x.reshape(rows, LANES)
    t2 = t.reshape(rows, LANES)

    kernel = _make_kernel(pos_weight, focal_alpha, focal_gamma,
                          bpc, n, needs_mask)

    def in_map(c, i):
        # Clamp so the duplicate "virtual" block of the last core re-reads a
        # real block (its contribution is zeroed by the in-kernel mask).
        return (jnp.minimum(c * bpc + i, total_blocks - 1), 0)

    parts = pl.pallas_call(
        kernel,
        out_shape=jax.ShapeDtypeStruct((NCORES, 4, LANES), jnp.float32),
        grid_spec=pltpu.PrefetchScalarGridSpec(
            num_scalar_prefetch=0,
            grid=(NCORES, bpc),
            in_specs=[
                pl.BlockSpec((bm, LANES), in_map),
                pl.BlockSpec((bm, LANES), in_map),
            ],
            out_specs=pl.BlockSpec((None, 4, LANES), lambda c, i: (c, 0, 0)),
        ),
        compiler_params=pltpu.CompilerParams(
            dimension_semantics=("parallel", "arbitrary")),
    )(x2, t2)

    # Final scalar combine (tiny) in the wrapper.
    sums = jnp.sum(parts, axis=(0, 2))         # (4,)
    inter, psum, tsum, fsum = sums[0], sums[1], sums[2], sums[3]
    dice = (2.0 * inter + smooth) / (psum + tsum + smooth)
    loss_dice = 1.0 - dice
    loss_focal = fsum / n
    return alpha_dice * loss_dice + alpha_focal * loss_focal


def combined_loss_ref(preds, targets, pos_weight=1.0, alpha_dice=0.5,
                      alpha_focal=0.5, focal_alpha=0.5, focal_gamma=2.0,
                      smooth=1e-6):
    """Plain-JAX reference mirroring the PyTorch module (with its 1e-8 eps)."""
    x = preds.reshape(-1).astype(jnp.float32)
    t = targets.reshape(-1).astype(jnp.float32)
    p = jax.nn.sigmoid(x)
    inter = jnp.sum(p * t)
    dice = (2.0 * inter + smooth) / (jnp.sum(p) + jnp.sum(t) + smooth)
    loss_dice = 1.0 - dice
    bce = (-pos_weight * t * jnp.log(p + 1e-8)
           - (1.0 - t) * jnp.log(1.0 - p + 1e-8))
    pt = jnp.exp(-bce)
    focal = focal_alpha * (1.0 - pt) ** focal_gamma * bce
    loss_focal = jnp.mean(focal)
    return alpha_dice * loss_dice + alpha_focal * loss_focal


if __name__ == "__main__":
    key = jax.random.PRNGKey(0)
    k1, k2 = jax.random.split(key)
    # Small segmentation-style logits / binary targets: (B, C, H, W) = (2, 4, 16, 16)
    preds = jax.random.normal(k1, (2, 4, 16, 16), dtype=jnp.float32)
    targets = jax.random.bernoulli(k2, 0.3, (2, 4, 16, 16)).astype(jnp.float32)

    loss = combined_loss(preds, targets)
    jax.block_until_ready(loss)

    ref = combined_loss_ref(preds, targets)
    # Tolerance accounts for the eps-free (clamped) softplus reformulation of
    # the BCE logs and f32 accumulation-order differences.
    assert jnp.allclose(loss, ref, rtol=1e-4, atol=1e-5), (loss, ref)
    print("KERNEL_OK")
</pallas_src>

<mosaic_0001>
module attributes {stable_mosaic.version = 11 : i64} {
  func.func @kernel(%arg0: i32, %arg1: i32, %arg2: memref<16x128xf32, #tpu.memory_space<vmem>>, %arg3: memref<16x128xf32, #tpu.memory_space<vmem>>, %arg4: memref<1x4x128xf32, #tpu.memory_space<vmem>>) attributes {dimension_semantics = [#tpu.dimension_semantics<parallel>, #tpu.dimension_semantics<arbitrary>], iteration_bounds = array<i64: 2, 1>, scalar_prefetch = 0 : i64, scratch_operands = 0 : i64, tpu.core_type = #tpu.core_type<tc>, window_params = [{transform_indices = @transform_0, window_bounds = array<i64: 16, 128>}, {transform_indices = @transform_1, window_bounds = array<i64: 16, 128>}, {transform_indices = @transform_2, window_bounds = array<i64: 1, 4, 128>}]} {
    %c0_i32 = arith.constant 0 : i32
    %0 = arith.cmpi eq, %arg1, %c0_i32 : i32
    %1 = arith.extui %0 : i1 to i32
    %c0_i32_0 = arith.constant 0 : i32
    %2 = arith.cmpi ne, %1, %c0_i32_0 : i32
    scf.if %2 {
      %cst_33 = arith.constant 0.000000e+00 : f32
      %84 = vector.broadcast %cst_33 : f32 to vector<4x128xf32>
      %c0_34 = arith.constant 0 : index
      %c0_35 = arith.constant 0 : index
      %c0_36 = arith.constant 0 : index
      %85 = vector.load %arg4[%c0_34, %c0_35, %c0_36] : memref<1x4x128xf32, #tpu.memory_space<vmem>>, vector<1x4x128xf32>
      %86 = vector.shape_cast %85 : vector<1x4x128xf32> to vector<4x128xf32>
      %87 = vector.shape_cast %84 : vector<4x128xf32> to vector<1x4x128xf32>
      tpu.vector_store %arg4[%c0_34, %c0_35, %c0_36], %87 {strides = array<i32>} : memref<1x4x128xf32, #tpu.memory_space<vmem>>, vector<1x4x128xf32>,
    } else {
    }
    %c0 = arith.constant 0 : index
    %c0_1 = arith.constant 0 : index
    %3 = vector.load %arg2[%c0, %c0_1] : memref<16x128xf32, #tpu.memory_space<vmem>>, vector<16x128xf32>
    %c0_2 = arith.constant 0 : index
    %c0_3 = arith.constant 0 : index
    %4 = vector.load %arg3[%c0_2, %c0_3] : memref<16x128xf32, #tpu.memory_space<vmem>>, vector<16x128xf32>
    %5 = tpu.iota {dimensions = array<i32: 0>} : vector<16x128xi32>
    %6 = tpu.iota {dimensions = array<i32: 1>} : vector<16x128xi32>
    %c1_i32 = arith.constant 1 : i32
    %7 = arith.muli %arg0, %c1_i32 : i32
    %8 = arith.addi %7, %arg1 : i32
    %c2048_i32 = arith.constant 2048 : i32
    %9 = arith.muli %8, %c2048_i32 : i32
    %c128_i32 = arith.constant 128 : i32
    %10 = vector.broadcast %c128_i32 : i32 to vector<16x128xi32>
    %11 = arith.muli %5, %10 : vector<16x128xi32>
    %12 = vector.broadcast %9 : i32 to vector<16x128xi32>
    %13 = arith.addi %12, %11 : vector<16x128xi32>
    %14 = arith.addi %13, %6 : vector<16x128xi32>
    %c2048_i32_4 = arith.constant 2048 : i32
    %15 = vector.broadcast %c2048_i32_4 : i32 to vector<16x128xi32>
    %16 = arith.cmpi slt, %14, %15 : vector<16x128xi32>
    %cst = arith.constant 0.000000e+00 : f32
    %17 = vector.broadcast %cst : f32 to vector<16x128xf32>
    %18 = arith.select %16, %3, %17 : vector<16x128xi1>, vector<16x128xf32>
    %cst_5 = arith.constant 0.000000e+00 : f32
    %19 = vector.broadcast %cst_5 : f32 to vector<16x128xf32>
    %20 = arith.select %16, %4, %19 : vector<16x128xi1>, vector<16x128xf32>
    %21 = math.absf %18 : vector<16x128xf32>
    %cst_6 = arith.constant 0.000000e+00 : f32
    %22 = vector.broadcast %cst_6 : f32 to vector<16x128xf32>
    %23 = arith.subf %22, %21 : vector<16x128xf32>
    %24 = math.exp %23 : vector<16x128xf32>
    %cst_7 = arith.constant 1.000000e+00 : f32
    %25 = vector.broadcast %cst_7 : f32 to vector<16x128xf32>
    %26 = arith.addf %25, %24 : vector<16x128xf32>
    %cst_8 = arith.constant 1.000000e+00 : f32
    %27 = vector.broadcast %cst_8 : f32 to vector<16x128xf32>
    %28 = arith.divf %27, %26 : vector<16x128xf32>
    %cst_9 = arith.constant 0.000000e+00 : f32
    %29 = vector.broadcast %cst_9 : f32 to vector<16x128xf32>
    %30 = arith.cmpf oge, %18, %29 : vector<16x128xf32>
    %31 = arith.mulf %24, %28 : vector<16x128xf32>
    %32 = arith.select %30, %28, %31 : vector<16x128xi1>, vector<16x128xf32>
    %cst_10 = arith.constant 1.000000e+00 : f32
    %33 = vector.broadcast %cst_10 : f32 to vector<16x128xf32>
    %34 = arith.addf %33, %24 : vector<16x128xf32>
    %35 = math.log %34 : vector<16x128xf32>
    %cst_11 = arith.constant 0.000000e+00 : f32
    %36 = vector.broadcast %cst_11 : f32 to vector<16x128xf32>
    %37 = arith.subf %36, %18 : vector<16x128xf32>
    %cst_12 = arith.constant 0.000000e+00 : f32
    %38 = vector.broadcast %cst_12 : f32 to vector<16x128xf32>
    %39 = arith.maximumf %37, %38 : vector<16x128xf32>
    %40 = arith.addf %39, %35 : vector<16x128xf32>
    %cst_13 = arith.constant 18.420681 : f32
    %41 = vector.broadcast %cst_13 : f32 to vector<16x128xf32>
    %42 = arith.minimumf %40, %41 : vector<16x128xf32>
    %cst_14 = arith.constant 0.000000e+00 : f32
    %43 = vector.broadcast %cst_14 : f32 to vector<16x128xf32>
    %44 = arith.maximumf %18, %43 : vector<16x128xf32>
    %45 = arith.addf %44, %35 : vector<16x128xf32>
    %cst_15 = arith.constant 18.420681 : f32
    %46 = vector.broadcast %cst_15 : f32 to vector<16x128xf32>
    %47 = arith.minimumf %45, %46 : vector<16x128xf32>
    %cst_16 = arith.constant 1.000000e+00 : f32
    %48 = vector.broadcast %cst_16 : f32 to vector<16x128xf32>
    %49 = arith.mulf %48, %20 : vector<16x128xf32>
    %50 = arith.mulf %49, %42 : vector<16x128xf32>
    %cst_17 = arith.constant 1.000000e+00 : f32
    %51 = vector.broadcast %cst_17 : f32 to vector<16x128xf32>
    %52 = arith.subf %51, %20 : vector<16x128xf32>
    %53 = arith.mulf %52, %47 : vector<16x128xf32>
    %54 = arith.addf %50, %53 : vector<16x128xf32>
    %cst_18 = arith.constant 0.000000e+00 : f32
    %55 = vector.broadcast %cst_18 : f32 to vector<16x128xf32>
    %56 = arith.subf %55, %54 : vector<16x128xf32>
    %57 = math.exp %56 : vector<16x128xf32>
    %cst_19 = arith.constant 1.000000e+00 : f32
    %58 = vector.broadcast %cst_19 : f32 to vector<16x128xf32>
    %59 = arith.subf %58, %57 : vector<16x128xf32>
    %60 = arith.mulf %59, %59 : vector<16x128xf32>
    %cst_20 = arith.constant 5.000000e-01 : f32
    %61 = vector.broadcast %cst_20 : f32 to vector<16x128xf32>
    %62 = arith.mulf %61, %60 : vector<16x128xf32>
    %63 = arith.mulf %62, %54 : vector<16x128xf32>
    %cst_21 = arith.constant 0.000000e+00 : f32
    %64 = vector.broadcast %cst_21 : f32 to vector<16x128xf32>
    %65 = arith.select %16, %32, %64 : vector<16x128xi1>, vector<16x128xf32>
    %cst_22 = arith.constant 0.000000e+00 : f32
    %66 = vector.broadcast %cst_22 : f32 to vector<16x128xf32>
    %67 = arith.select %16, %63, %66 : vector<16x128xi1>, vector<16x128xf32>
    %68 = arith.mulf %65, %20 : vector<16x128xf32>
    %cst_23 = arith.constant dense<0.000000e+00> : vector<128xf32>
    %69 = vector.multi_reduction <add>, %68, %cst_23 [0] : vector<16x128xf32> to vector<128xf32>
    %70 = vector.shape_cast %69 : vector<128xf32> to vector<1x128xf32>
    %cst_24 = arith.constant dense<0.000000e+00> : vector<128xf32>
    %71 = vector.multi_reduction <add>, %65, %cst_24 [0] : vector<16x128xf32> to vector<128xf32>
    %72 = vector.shape_cast %71 : vector<128xf32> to vector<1x128xf32>
    %cst_25 = arith.constant dense<0.000000e+00> : vector<128xf32>
    %73 = vector.multi_reduction <add>, %20, %cst_25 [0] : vector<16x128xf32> to vector<128xf32>
    %74 = vector.shape_cast %73 : vector<128xf32> to vector<1x128xf32>
    %cst_26 = arith.constant dense<0.000000e+00> : vector<128xf32>
    %75 = vector.multi_reduction <add>, %67, %cst_26 [0] : vector<16x128xf32> to vector<128xf32>
    %76 = vector.shape_cast %75 : vector<128xf32> to vector<1x128xf32>
    %c0_27 = arith.constant 0 : index
    %c0_28 = arith.constant 0 : index
    %c0_29 = arith.constant 0 : index
    %77 = vector.load %arg4[%c0_27, %c0_28, %c0_29] : memref<1x4x128xf32, #tpu.memory_space<vmem>>, vector<1x4x128xf32>
    %78 = vector.shape_cast %77 : vector<1x4x128xf32> to vector<4x128xf32>
    %79 = tpu.concatenate %70, %72, %74, %76 in 0 : vector<1x128xf32>, vector<1x128xf32>, vector<1x128xf32>, vector<1x128xf32> -> vector<4x128xf32>
    %80 = arith.addf %78, %79 : vector<4x128xf32>
    %c0_30 = arith.constant 0 : index
    %c0_31 = arith.constant 0 : index
    %c0_32 = arith.constant 0 : index
    %81 = vector.load %arg4[%c0_30, %c0_31, %c0_32] : memref<1x4x128xf32, #tpu.memory_space<vmem>>, vector<1x4x128xf32>
    %82 = vector.shape_cast %81 : vector<1x4x128xf32> to vector<4x128xf32>
    %83 = vector.shape_cast %80 : vector<4x128xf32> to vector<1x4x128xf32>
    tpu.vector_store %arg4[%c0_30, %c0_31, %c0_32], %83 {strides = array<i32>} : memref<1x4x128xf32, #tpu.memory_space<vmem>>, vector<1x4x128xf32>,
    return
  }
  func.func @transform_0(%arg0: i32, %arg1: i32) -> (i32, i32) {
    %c1_i32 = arith.constant 1 : i32
    %0 = arith.muli %arg0, %c1_i32 : i32
    %1 = arith.addi %0, %arg1 : i32
    %c0_i32 = arith.constant 0 : i32
    %2 = arith.minsi %1, %c0_i32 : i32
    %c0_i32_0 = arith.constant 0 : i32
    %c0_i32_1 = arith.constant 0 : i32
    return %2, %c0_i32_0 : i32, i32
  }
  func.func @transform_1(%arg0: i32, %arg1: i32) -> (i32, i32) {
    %c1_i32 = arith.constant 1 : i32
    %0 = arith.muli %arg0, %c1_i32 : i32
    %1 = arith.addi %0, %arg1 : i32
    %c0_i32 = arith.constant 0 : i32
    %2 = arith.minsi %1, %c0_i32 : i32
    %c0_i32_0 = arith.constant 0 : i32
    %c0_i32_1 = arith.constant 0 : i32
    return %2, %c0_i32_0 : i32, i32
  }
  func.func @transform_2(%arg0: i32, %arg1: i32) -> (i32, i32, i32) {
    %c0_i32 = arith.constant 0 : i32
    %c0_i32_0 = arith.constant 0 : i32
    %c0_i32_1 = arith.constant 0 : i32
    return %arg0, %c0_i32, %c0_i32_0 : i32, i32, i32
  }
}

</mosaic_0001>

<llo_original>
// kernel: combined_loss.1
$region0: #{combined_loss.1}
  #allocation0 [shape = 'u32[]', space=smem, size = 0x4, offset = 0x4, fixed_abs, tag = 'smem constant byte address 0x4 - core index']
  #allocation1 [shape = 'u32[144,128]{1,0:T(1,128)}', space=vmem, size = 0x12000, scoped, tag = 'internal scratch']
  %s0 = inlined_call_operand.vmem [shape: f32[16,128], index: 0, kind: input, shape index: {}]
  %s1 = inlined_call_operand.vmem [shape: f32[16,128], index: 1, kind: input, shape index: {}]
  %s2 = inlined_call_operand.vmem [shape: f32[2,4,128], index: 2, kind: output, shape index: {}]
  %s3 = sld [smem:[#allocation0]]
  $region45: #{combined_loss.1} parent=0
    _
  %s5 = ssub.s32 1, %s3
  %s6 = scalar_select 0, %s5, %s3
  loop: start=0, step=1, limit=4
  $region2: #{combined_loss.1} parent=0 // loop_pre_header
    _
  $region3: #{combined_loss.1} parent=0 // loop_header
    %s8 = sphi 0, %s12
    %p9 = scmp.ge.s32.totalorder %s8, 4
    %s15 = sphi 0, %s27
    %s16 = sphi 0, %s23
    %s17 = sphi 0, %s15
    %s18 = sphi 0, %s16
    %s19 = sphi 0, %s17
    %s20 = sphi 0, %s18
    %s36 = sphi 0, %s38
    %s39 = sphi 0, %s36
    %s40 = sphi 0, %s39
    %s56 = sphi 0, %s40
    %s68 = sphi 0, %s70
    %s71 = sphi 0, %s68
    %s72 = sphi 0, %s71
    %s88 = sphi 0, %s72
    %s94 = sphi 0, %s96
    %s97 = sphi 0, %s94
    %s98 = sphi 0, %s97
    %s114 = sphi 0, %s98
  $region4: #{combined_loss.1} parent=0 // loop_header_branch
    %11 = sbr.rel (%p9) target = $region8
  $region5: #{combined_loss.1} parent=0 // loop_body
    %s13 = ssub.s32 %s8, 1
    %s14 = ssub.s32 %s8, 2
    %s21 = sadd.s32 1, %s16
    %p22 = scmp.ge.s32.totalorder %s21, 1
    %s23 = scalar_select %p22, 0, %s21
    %s24 = sadd.s32 1, %s15
    %s25 = scalar_select %p22, %s24, %s15
    %p26 = scmp.ge.s32.totalorder %s25, 2
    %s27 = scalar_select %p26, 0, %s25
    %s28 = sadd.s32 %s15, %s16
    %p29 = scmp.lt.s32.totalorder %s28, 0
    %s30 = scalar_select %p29, %s28, 0
    %s31 = sadd.s32 %s27, %s23
    %p32 = scmp.lt.s32.totalorder %s31, 0
    %s33 = scalar_select %p32, %s31, 0
    %s34 = ssub.s32 %s30, %s33
    %p35 = scmp.eq.s32.totalorder %s34, 0
    %s37 = sadd.s32 %s36, 1
    %s38 = scalar_select %p35, %s36, %s37
    %p41 = pneg %p35
    %p42 = scmp.eq.s32.totalorder %s8, 1
    %p43 = por %p41, %p42
    %p44 = scmp.ne.s32.totalorder %s36, %s39
    %p45 = scmp.eq.s32.totalorder %s8, 0
    %p46 = por %p44, %p45
    %p47 = scmp.ne.s32.totalorder %s36, %s39
    %p48 = scmp.eq.s32.totalorder %s13, 1
    %p49 = por %p47, %p48
    %p50 = scmp.ne.s32.totalorder %s39, %s40
    %p51 = scmp.eq.s32.totalorder %s13, 0
    %p52 = por %p50, %p51
    %p53 = scmp.ne.s32.totalorder %s39, %s40
    %p54 = scmp.eq.s32.totalorder %s14, 1
    %p55 = por %p53, %p54
    %p57 = scmp.ne.s32.totalorder %s40, %s56
    %p58 = scmp.eq.s32.totalorder %s14, 0
    %p59 = por %p57, %p58
    %s60 = sadd.s32 %s15, %s16
    %p61 = scmp.lt.s32.totalorder %s60, 0
    %s62 = scalar_select %p61, %s60, 0
    %s63 = sadd.s32 %s27, %s23
    %p64 = scmp.lt.s32.totalorder %s63, 0
    %s65 = scalar_select %p64, %s63, 0
    %s66 = ssub.s32 %s62, %s65
    %p67 = scmp.eq.s32.totalorder %s66, 0
    %s69 = sadd.s32 %s68, 1
    %s70 = scalar_select %p67, %s68, %s69
    %p73 = pneg %p67
    %p74 = scmp.eq.s32.totalorder %s8, 1
    %p75 = por %p73, %p74
    %p76 = scmp.ne.s32.totalorder %s68, %s71
    %p77 = scmp.eq.s32.totalorder %s8, 0
    %p78 = por %p76, %p77
    %p79 = scmp.ne.s32.totalorder %s68, %s71
    %p80 = scmp.eq.s32.totalorder %s13, 1
    %p81 = por %p79, %p80
    %p82 = scmp.ne.s32.totalorder %s71, %s72
    %p83 = scmp.eq.s32.totalorder %s13, 0
    %p84 = por %p82, %p83
    %p85 = scmp.ne.s32.totalorder %s71, %s72
    %p86 = scmp.eq.s32.totalorder %s14, 1
    %p87 = por %p85, %p86
    %p89 = scmp.ne.s32.totalorder %s72, %s88
    %p90 = scmp.eq.s32.totalorder %s14, 0
    %p91 = por %p89, %p90
    %s92 = ssub.s32 %s15, %s27
    %p93 = scmp.eq.s32.totalorder %s92, 0
    %s95 = sadd.s32 %s94, 1
    %s96 = scalar_select %p93, %s94, %s95
    %p99 = pneg %p93
    %p100 = scmp.eq.s32.totalorder %s8, 1
    %p101 = por %p99, %p100
    %p102 = scmp.ne.s32.totalorder %s94, %s97
    %p103 = scmp.eq.s32.totalorder %s8, 0
    %p104 = por %p102, %p103
    %p105 = scmp.ne.s32.totalorder %s94, %s97
    %p106 = scmp.eq.s32.totalorder %s13, 1
    %p107 = por %p105, %p106
    %p108 = scmp.ne.s32.totalorder %s97, %s98
    %p109 = scmp.eq.s32.totalorder %s13, 0
    %p110 = por %p108, %p109
    %p111 = scmp.ne.s32.totalorder %s97, %s98
    %p112 = scmp.eq.s32.totalorder %s14, 1
    %p113 = por %p111, %p112
    %p115 = scmp.ne.s32.totalorder %s98, %s114
    %p116 = scmp.eq.s32.totalorder %s14, 0
    %p117 = por %p115, %p116
    %p118 = scmp.le.s32.totalorder 1, %s8
    %p119 = scmp.lt.s32.totalorder %s8, 3
    %p120 = pnand %p118, %p119
    %p121 = pneg %p120
    // Predicated region
    $region9: #{combined_loss.1} parent=5 // pred_check
      _
    $region10: #{combined_loss.1} parent=5 // pred_check_branch
      %123 = sbr.rel (%p120) target = $region12
    $region11: #{combined_loss.1} parent=5 // pred_region
      %s124 = ssub.s32 %s8, 1
    $region12: #{combined_loss.1} parent=5 // pred_fallthru
      _
    %p125 = scmp.lt.s32.totalorder %s8, 2
    // Predicated region
    $region13: #{combined_loss.1} parent=5 // pred_check
      %p126 = pneg %p125
    $region14: #{combined_loss.1} parent=5 // pred_check_branch
      %128 = sbr.rel (%p126) target = $region16
    $region15: #{combined_loss.1} parent=5 // pred_region
      // Predicated region
      $region17: #{combined_loss.1} parent=15 // pred_check
        %p129 = pneg %p46
      $region18: #{combined_loss.1} parent=15 // pred_check_branch
        %131 = sbr.rel (%p129) target = $region20
      $region19: #{combined_loss.1} parent=15 // pred_region
        %s132 = sadd.s32 %s15, %s16
        %p133 = scmp.lt.s32.totalorder %s132, 0
        %s134 = scalar_select %p133, %s132, 0
        %s135 = smul.u32 2, %s134
        %p136 = scmp.lt.s32.totalorder %s135, 1
        %s137 = scalar_select %p136, %s135, 1
        %s138 = smul.addr %s137, 8
        %s139 = scalar_lea.vmem %s0, %s138
        %s140 = sadd.s32 %s15, %s16
        %p141 = scmp.lt.s32.totalorder %s140, 0
        %s142 = scalar_select %p141, %s140, 0
        %s143 = smul.u32 2, %s142
      $region20: #{combined_loss.1} parent=15 // pred_fallthru
        _
      // Predicated region
      $region21: #{combined_loss.1} parent=15 // pred_check
        %p144 = pneg %p78
      $region22: #{combined_loss.1} parent=15 // pred_check_branch
        %146 = sbr.rel (%p144) target = $region24
      $region23: #{combined_loss.1} parent=15 // pred_region
        %s147 = sadd.s32 %s15, %s16
        %p148 = scmp.lt.s32.totalorder %s147, 0
        %s149 = scalar_select %p148, %s147, 0
        %s150 = smul.u32 2, %s149
        %p151 = scmp.lt.s32.totalorder %s150, 1
        %s152 = scalar_select %p151, %s150, 1
        %s153 = smul.addr %s152, 8
        %s154 = scalar_lea.vmem %s1, %s153
        %s155 = sadd.s32 %s15, %s16
        %p156 = scmp.lt.s32.totalorder %s155, 0
        %s157 = scalar_select %p156, %s155, 0
        %s158 = smul.u32 2, %s157
      $region24: #{combined_loss.1} parent=15 // pred_fallthru
        _
    $region16: #{combined_loss.1} parent=5 // pred_fallthru
      _
    %p159 = scmp.le.s32.totalorder 1, %s8
    %p160 = scmp.lt.s32.totalorder %s8, 3
    %p161 = pnand %p159, %p160
    %p162 = pneg %p161
    // Predicated region
    $region25: #{combined_loss.1} parent=5 // pred_check
      _
    $region26: #{combined_loss.1} parent=5 // pred_check_branch
      %164 = sbr.rel (%p161) target = $region28
    $region27: #{combined_loss.1} parent=5 // pred_region
      %s165 = ssub.s32 %s8, 1
      %s166 = sadd.s32 %s17, %s18
      %p167 = scmp.lt.s32.totalorder %s166, 0
      %s168 = scalar_select %p167, %s166, 0
      %s169 = smul.u32 2, %s168
      %p170 = scmp.lt.s32.totalorder %s169, 1
      %s171 = scalar_select %p170, %s169, 1
      %s172 = smul.addr %s171, 8
      %s173 = scalar_lea.vmem %s0, %s172
      %p174 = pneg %p52
      %p175 = pneg %p49
      %s176 = sadd.s32 %s17, %s18
      %p177 = scmp.lt.s32.totalorder %s176, 0
      %s178 = scalar_select %p177, %s176, 0
      %s179 = smul.u32 2, %s178
      %p180 = scmp.lt.s32.totalorder %s179, 1
      %s181 = scalar_select %p180, %s179, 1
      %s182 = smul.addr %s181, 8
      %s183 = scalar_lea.vmem %s1, %s182
      %p184 = pneg %p84
      %p185 = pneg %p81
      %p186 = pneg %p110
      %p187 = pneg %p107
      %p188 = scmp.lt.s32.totalorder %s17, 1
      %s189 = scalar_select %p188, %s17, 1
      %s190 = smul.addr %s189, 4
      %s191 = scalar_lea.vmem %s2, %s190
      %s192 = sadd.s32 %s17, %s18
      %p193 = scmp.lt.s32.totalorder %s192, 0
      %s194 = scalar_select %p193, %s192, 0
      %s195 = smul.u32 2, %s194
      %p196 = scmp.lt.s32.totalorder %s195, 1
      %s197 = scalar_select %p196, %s195, 1
      %s198 = smul.addr %s197, 8
      %s199 = scalar_lea.vmem %s0, %s198
      %s200 = sadd.s32 %s17, %s18
      %p201 = scmp.lt.s32.totalorder %s200, 0
      %s202 = scalar_select %p201, %s200, 0
      %s203 = smul.u32 2, %s202
      %s204 = sadd.s32 %s17, %s18
      %p205 = scmp.lt.s32.totalorder %s204, 0
      %s206 = scalar_select %p205, %s204, 0
      %s207 = smul.u32 2, %s206
      %p208 = scmp.lt.s32.totalorder %s207, 1
      %s209 = scalar_select %p208, %s207, 1
      %s210 = smul.addr %s209, 8
      %s211 = scalar_lea.vmem %s1, %s210
      %s212 = sadd.s32 %s17, %s18
      %p213 = scmp.lt.s32.totalorder %s212, 0
      %s214 = scalar_select %p213, %s212, 0
      %s215 = smul.u32 2, %s214
      %p216 = scmp.lt.s32.totalorder %s17, 1
      %s217 = scalar_select %p216, %s17, 1
      %s218 = smul.addr %s217, 4
      %s219 = scalar_lea.vmem %s2, %s218
      %p220 = scmp.eq.s32.totalorder %s18, 0
      // Predicated region
      $region29: #{combined_loss.1} parent=27 // pred_check
        %p221 = pneg %p220
      $region30: #{combined_loss.1} parent=27 // pred_check_branch
        %223 = sbr.rel (%p221) target = $region32
      $region31: #{combined_loss.1} parent=27 // pred_region
        %224 = vst [vmem:[%s219] sm:$0xf] 0.0
      $region32: #{combined_loss.1} parent=27 // pred_fallthru
        _
      %v225 = vld [vmem:[%s199] sm:$0xff]
      %v226 = vld [vmem:[%s199 + $0x8] sm:$0xff]
      %v227 = vld [vmem:[%s211] sm:$0xff]
      %v228 = vld [vmem:[%s211 + $0x8] sm:$0xff]
      %v229 = vlaneseq
      %v230 = vshrl.u32 %v229, 7
      %v231 = vadd.s32 %v230, 8
      %v232 = vlaneseq
      %v233 = vand.u32 %v232, 127
      %s234 = sadd.s32 %s17, %s18
      %s235 = smul.u32 %s234, 2048
      %v236 = vmul.u32 %v230, 128
      %v237 = vmul.u32 %v231, 128
      %v238 = vstv %s235
      %v239 = vadd.s32 %v238, %v236
      %v240 = vadd.s32 %v238, %v237
      %v241 = vadd.s32 %v239, %v233
      %v242 = vadd.s32 %v240, %v233
      %vm243 = vcmp.lt.s32.totalorder %v241, 2048
      %vm244 = vcmp.lt.s32.totalorder %v242, 2048
      %v245 = vsel %vm243, %v225, 0.0
      %v246 = vsel %vm244, %v226, 0.0
      %v247 = vsel %vm243, %v227, 0.0
      %v248 = vsel %vm244, %v228, 0.0
      %v249 = vand.u32 2147483647, %v245
      %v250 = vand.u32 2147483647, %v246
      %v251 = vsub.f32 0.0, %v249
      %v252 = vsub.f32 0.0, %v250
      %v253 = vmul.f32 %v251, 1.442695
      %v254 = vpow.pop %v253
      %v255 = vmul.f32 %v252, 1.442695
      %v256 = vpow.pop %v255
      %v257 = vadd.f32 %v254, 1.0
      %v258 = vadd.f32 %v256, 1.0
      %v259 = vrcp.pop %v257
      %v260 = vmul.f32 1.0, %v259
      %v261 = vrcp.pop %v258
      %v262 = vmul.f32 1.0, %v261
      %vm263 = vcmp.ge.f32.partialorder %v245, 0.0
      %vm264 = vcmp.ge.f32.partialorder %v246, 0.0
      %v265 = vmul.f32 %v254, %v260
      %v266 = vmul.f32 %v256, %v262
      %v267 = vsel %vm263, %v260, %v265
      %v268 = vsel %vm264, %v262, %v266
      %v269 = vlog2.pop %v257
      %v270 = vmul.f32 %v269, 0.6931472
      %v271 = vlog2.pop %v258
      %v272 = vmul.f32 %v271, 0.6931472
      %v273 = vsub.f32 0.0, %v245
      %v274 = vsub.f32 0.0, %v246
      %v275 = vmax.f32 %v273, 0.0
      %v276 = vmax.f32 %v274, 0.0
      %v277 = vadd.f32 %v275, %v270
      %v278 = vadd.f32 %v276, %v272
      %v279 = vmin.f32 %v277, 18.420681
      %v280 = vmin.f32 %v278, 18.420681
      %v281 = vmax.f32 %v245, 0.0
      %v282 = vmax.f32 %v246, 0.0
      %v283 = vadd.f32 %v281, %v270
      %v284 = vadd.f32 %v282, %v272
      %v285 = vmin.f32 %v283, 18.420681
      %v286 = vmin.f32 %v284, 18.420681
      %v287 = vmul.f32 %v247, %v279
      %v288 = vmul.f32 %v248, %v280
      %v289 = vsub.f32 1.0, %v247
      %v290 = vsub.f32 1.0, %v248
      %v291 = vmul.f32 %v289, %v285
      %v292 = vmul.f32 %v290, %v286
      %v293 = vadd.f32 %v287, %v291
      %v294 = vadd.f32 %v288, %v292
      %v295 = vsub.f32 0.0, %v293
      %v296 = vsub.f32 0.0, %v294
      %v297 = vmul.f32 %v295, 1.442695
      %v298 = vpow.pop %v297
      %v299 = vmul.f32 %v296, 1.442695
      %v300 = vpow.pop %v299
      %v301 = vsub.f32 1.0, %v298
      %v302 = vsub.f32 1.0, %v300
      %v303 = vmul.f32 %v301, %v301
      %v304 = vmul.f32 %v302, %v302
      %v305 = vmul.f32 %v303, 0.5
      %v306 = vmul.f32 %v304, 0.5
      %v307 = vmul.f32 %v305, %v293
      %v308 = vmul.f32 %v306, %v294
      %v309 = vsel %vm243, %v267, 0.0
      %v310 = vsel %vm244, %v268, 0.0
      %v311 = vsel %vm243, %v307, 0.0
      %v312 = vsel %vm244, %v308, 0.0
      %v313 = vmul.f32 %v309, %v247
      %v314 = vmul.f32 %v310, %v248
      %v315 = vadd.f32 %v313, %v314
      %v316 = vrot.slane %v315, 4
      %v317 = vadd.f32 %v315, %v316
      %v318 = vrot.slane %v317, 2
      %v319 = vadd.f32 %v317, %v318
      %v320 = vrot.slane %v319, 1
      %v321 = vadd.f32 %v319, %v320
      %v322 = vadd.f32 %v309, %v310
      %v323 = vrot.slane %v322, 4
      %v324 = vadd.f32 %v322, %v323
      %v325 = vrot.slane %v324, 2
      %v326 = vadd.f32 %v324, %v325
      %v327 = vrot.slane %v326, 1
      %v328 = vadd.f32 %v326, %v327
      %v329 = vadd.f32 %v247, %v248
      %v330 = vrot.slane %v329, 4
      %v331 = vadd.f32 %v329, %v330
      %v332 = vrot.slane %v331, 2
      %v333 = vadd.f32 %v331, %v332
      %v334 = vrot.slane %v333, 1
      %v335 = vadd.f32 %v333, %v334
      %v336 = vadd.f32 %v311, %v312
      %v337 = vrot.slane %v336, 4
      %v338 = vadd.f32 %v336, %v337
      %v339 = vrot.slane %v338, 2
      %v340 = vadd.f32 %v338, %v339
      %v341 = vrot.slane %v340, 1
      %v342 = vadd.f32 %v340, %v341
      %v343 = vld [vmem:[%s219] sm:$0xf]
      %vm344 = vcmask 1040384
      %v345 = vsel %vm344, %v321, %v328
      %vm346 = vcmask 1041408
      %v347 = vsel %vm346, %v345, %v335
      %vm348 = vcmask 1042432
      %v349 = vsel %vm348, %v347, %v342
      %v350 = vadd.f32 %v343, %v349
      %351 = vst [vmem:[%s219] sm:$0xf] %v350
      %p352 = scmp.lt.s32.totalorder %s17, 1
      %s353 = scalar_select %p352, %s17, 1
      %s354 = smul.addr %s353, 4
      %s355 = scalar_lea.vmem %s2, %s354
      // Predicated region
      $region33: #{combined_loss.1} parent=27 // pred_check
        %p356 = pneg %p107
      $region34: #{combined_loss.1} parent=27 // pred_check_branch
        %358 = sbr.rel (%p356) target = $region36
      $region35: #{combined_loss.1} parent=27 // pred_region
        _
      $region36: #{combined_loss.1} parent=27 // pred_fallthru
        _
    $region28: #{combined_loss.1} parent=5 // pred_fallthru
      _
    %p359 = scmp.le.s32.totalorder 2, %s8
    // Predicated region
    $region37: #{combined_loss.1} parent=5 // pred_check
      %p360 = pneg %p359
    $region38: #{combined_loss.1} parent=5 // pred_check_branch
      %362 = sbr.rel (%p360) target = $region40
    $region39: #{combined_loss.1} parent=5 // pred_region
      %s363 = ssub.s32 %s8, 2
      // Predicated region
      $region41: #{combined_loss.1} parent=39 // pred_check
        %p364 = pneg %p113
      $region42: #{combined_loss.1} parent=39 // pred_check_branch
        %366 = sbr.rel (%p364) target = $region44
      $region43: #{combined_loss.1} parent=39 // pred_region
        %p367 = scmp.lt.s32.totalorder %s19, 1
        %s368 = scalar_select %p367, %s19, 1
        %s369 = smul.addr %s368, 4
        %s370 = scalar_lea.vmem %s2, %s369
      $region44: #{combined_loss.1} parent=39 // pred_fallthru
        _
    $region40: #{combined_loss.1} parent=5 // pred_fallthru
      _
  $region6: #{combined_loss.1} parent=0 // loop_footer
    %s12 = sadd.s32 1, %s8
  $region7: #{combined_loss.1} parent=0 // loop_footer_branch
    %7 = sbr.rel target = $region3
  $region8: #{combined_loss.1} parent=0 // loop_exit
    _

</llo_original>
